<compile_context>
chip_gen: v7x
topology: tpu7x:2x2x1
jax: 0.10.0
libtpu: 0.0.40
codegen_flags: <defaults>
</compile_context>

<pallas_src>
import functools

import jax
import jax.numpy as jnp
from jax.experimental import pallas as pl
from jax.experimental.pallas import tpu as pltpu


def _round_up(x, m):
    return (x + m - 1) // m * m


# --------------------------------------------------------------------------
# Call-once parameter preprocessing (hoisted out of the per-call path).
# --------------------------------------------------------------------------
def prepare_params(params, *, input_size, hidden_size, attention_dim,
                   mxu_dtype=jnp.float32):
    """Transpose, concatenate and lane-pad weights once.

    Layouts produced (f32 unless mxu_dtype says otherwise for MXU operands):
      w_lin    : (input_size, HP)    Linear weight, transposed, lane-padded
      b_lin    : (1, HP)
      w_ih_cat : (HP, 3*GP)          gates [r|z|n] at lane offsets 0/GP/2GP
      w_hh_cat : (GP, 3*GP)
      b_i_cat  : (1, 3*GP)           [b_ir+b_hr | b_iz+b_hz | b_in]
      b_hn     : (1, GP)             hidden-side bias of the n gate only
    """
    A = attention_dim
    H = hidden_size
    GP = _round_up(A, 128)   # lane-padded gate pitch
    HP = _round_up(H, 128)   # lane-padded Linear-output / GRU-input width
    f32 = jnp.float32

    # Linear: PyTorch weight is (H, input_size) -> (input_size, HP), padded.
    w_lin = jnp.zeros((input_size, HP), f32).at[:, :H].set(
        params["w_lin"].astype(f32).T)
    b_lin = jnp.zeros((1, HP), f32).at[0, :H].set(params["b_lin"].astype(f32))

    # GRUCell concatenated weights, PyTorch gate order [r | z | n].
    w_ih = params["w_ih"].astype(f32)   # (3A, H)
    w_hh = params["w_hh"].astype(f32)   # (3A, A)
    b_ih = params["b_ih"].astype(f32)   # (3A,)
    b_hh = params["b_hh"].astype(f32)   # (3A,)

    w_ih_cat = jnp.zeros((HP, 3 * GP), f32)
    w_hh_cat = jnp.zeros((GP, 3 * GP), f32)
    for g in range(3):
        w_ih_cat = w_ih_cat.at[:H, g * GP:g * GP + A].set(
            w_ih[g * A:(g + 1) * A].T)
        w_hh_cat = w_hh_cat.at[:A, g * GP:g * GP + A].set(
            w_hh[g * A:(g + 1) * A].T)

    # Pre-combined biases: r and z gates can merge input/hidden biases.
    b_i_cat = jnp.zeros((1, 3 * GP), f32)
    b_i_cat = b_i_cat.at[0, 0 * GP:0 * GP + A].set(b_ih[0:A] + b_hh[0:A])
    b_i_cat = b_i_cat.at[0, 1 * GP:1 * GP + A].set(b_ih[A:2 * A] + b_hh[A:2 * A])
    b_i_cat = b_i_cat.at[0, 2 * GP:2 * GP + A].set(b_ih[2 * A:3 * A])
    b_hn = jnp.zeros((1, GP), f32).at[0, :A].set(b_hh[2 * A:3 * A])

    return {
        "w_lin": w_lin.astype(mxu_dtype),
        "b_lin": b_lin,
        "w_ih_cat": w_ih_cat.astype(mxu_dtype),
        "w_hh_cat": w_hh_cat.astype(mxu_dtype),
        "b_i_cat": b_i_cat,
        "b_hn": b_hn,
        "meta": dict(input_size=input_size, hidden_size=hidden_size,
                     attention_dim=A, GP=GP, HP=HP, mxu_dtype=mxu_dtype),
    }


# --------------------------------------------------------------------------
# Kernel: Linear + ReLU + GRUCell, all gates fused, lane-dense layout.
# --------------------------------------------------------------------------
def _motion_encoder_kernel(x_ref, h_ref,
                           w_lin_ref, b_lin_ref,
                           w_ih_ref, w_hh_ref,
                           b_i_ref, b_hn_ref,
                           out_ref, *, mxu_dtype):
    GP = h_ref.shape[-1]

    x = x_ref[...]                      # (TILE_N, input_size)     f32
    h = h_ref[...]                      # (TILE_N, GP)             f32 (padded)

    # Linear + ReLU:  xh = relu(x @ W_lin^T + b_lin), lane-padded to HP.
    xw = jnp.dot(x.astype(mxu_dtype), w_lin_ref[...],
                 preferred_element_type=jnp.float32)
    xh = jnp.maximum(xw + b_lin_ref[...], 0.0)            # (TILE_N, HP)

    # Fused GRU matmuls: one input-side and one hidden-side MXU push.
    gi = jnp.dot(xh.astype(mxu_dtype), w_ih_ref[...],
                 preferred_element_type=jnp.float32) + b_i_ref[...]
    gh = jnp.dot(h.astype(mxu_dtype), w_hh_ref[...],
                 preferred_element_type=jnp.float32)       # (TILE_N, 3GP)

    # Gate slices are at 128-lane-aligned offsets 0 / GP / 2GP.
    r = jax.nn.sigmoid(gi[:, 0:GP] + gh[:, 0:GP])
    z = jax.nn.sigmoid(gi[:, GP:2 * GP] + gh[:, GP:2 * GP])
    n = jnp.tanh(gi[:, 2 * GP:3 * GP]
                 + r * (gh[:, 2 * GP:3 * GP] + b_hn_ref[...]))

    out_ref[...] = ((1.0 - z) * n + z * h).astype(out_ref.dtype)


# --------------------------------------------------------------------------
# Wrapper: grid over N with resident weights.
# --------------------------------------------------------------------------
def motion_encoder(x, hidden, prepped, *, tile_n=512):
    meta = prepped["meta"]
    IN = meta["input_size"]
    A = meta["attention_dim"]
    GP = meta["GP"]
    HP = meta["HP"]
    mxu_dtype = meta["mxu_dtype"]

    x2d = x.reshape(-1, IN).astype(jnp.float32)
    h = hidden.astype(jnp.float32)
    N = x2d.shape[0]
    assert h.shape == (N, A)

    # Row tile: multiple of 8 (f32 sublane); activations + resident weights fit
    # comfortably in VMEM even against v7x's 64 MiB / 32 MiB-scoped budget.
    TILE_N = min(tile_n, _round_up(N, 8))
    N_pad = _round_up(N, TILE_N)

    if N_pad != N:
        x2d = jnp.pad(x2d, ((0, N_pad - N), (0, 0)))
    # Lane-pad the hidden state to GP so every gate op and the output store
    # are lane-dense (padded lanes compute to 0 and are sliced off below).
    h_pad = jnp.zeros((N_pad, GP), jnp.float32).at[:N, :A].set(h)

    grid = (N_pad // TILE_N,)
    kernel = functools.partial(_motion_encoder_kernel, mxu_dtype=mxu_dtype)

    flops = 2 * N_pad * (IN * HP + HP * 3 * GP + GP * 3 * GP) + 10 * N_pad * GP
    transcendentals = 3 * N_pad * GP
    bytes_accessed = 4 * (N_pad * (IN + 2 * GP)
                          + IN * HP + HP
                          + HP * 3 * GP + GP * 3 * GP + 3 * GP + GP)

    out = pl.pallas_call(
        kernel,
        out_shape=jax.ShapeDtypeStruct((N_pad, GP), jnp.float32),
        grid=grid,
        in_specs=[
            pl.BlockSpec((TILE_N, IN), lambda i: (i, 0)),      # x tile
            pl.BlockSpec((TILE_N, GP), lambda i: (i, 0)),      # h tile
            pl.BlockSpec((IN, HP), lambda i: (0, 0)),          # resident weights
            pl.BlockSpec((1, HP), lambda i: (0, 0)),
            pl.BlockSpec((HP, 3 * GP), lambda i: (0, 0)),
            pl.BlockSpec((GP, 3 * GP), lambda i: (0, 0)),
            pl.BlockSpec((1, 3 * GP), lambda i: (0, 0)),
            pl.BlockSpec((1, GP), lambda i: (0, 0)),
        ],
        out_specs=pl.BlockSpec((TILE_N, GP), lambda i: (i, 0)),
        compiler_params=pltpu.CompilerParams(
            dimension_semantics=("parallel",)),
        cost_estimate=pl.CostEstimate(flops=flops,
                                      transcendentals=transcendentals,
                                      bytes_accessed=bytes_accessed),
    )(x2d, h_pad,
      prepped["w_lin"], prepped["b_lin"],
      prepped["w_ih_cat"], prepped["w_hh_cat"],
      prepped["b_i_cat"], prepped["b_hn"])

    return out[:N, :A]


# --------------------------------------------------------------------------
# Pure-JAX reference mirroring the PyTorch forward.
# --------------------------------------------------------------------------
def _reference(x, hidden, params, *, hidden_size, attention_dim):
    A = attention_dim
    x2d = x.reshape(-1, x.shape[-1])
    xh = jax.nn.relu(x2d @ params["w_lin"].T + params["b_lin"])
    gi = xh @ params["w_ih"].T + params["b_ih"]
    gh = hidden @ params["w_hh"].T + params["b_hh"]
    r = jax.nn.sigmoid(gi[:, 0:A] + gh[:, 0:A])
    z = jax.nn.sigmoid(gi[:, A:2 * A] + gh[:, A:2 * A])
    n = jnp.tanh(gi[:, 2 * A:] + r * gh[:, 2 * A:])
    return (1.0 - z) * n + z * hidden


if __name__ == "__main__":
    # Shapes consistent with the module:
    #   input_size=16, hidden_size=32, attention_dim=32
    #   input: (batch=2, seq=4, input_size=16), hidden: (2*4, attention_dim)
    input_size, hidden_size, attention_dim = 16, 32, 32
    B, T = 2, 4
    N = B * T

    key = jax.random.PRNGKey(0)
    keys = jax.random.split(key, 8)

    k_lin = 1.0 / jnp.sqrt(input_size)
    k_gru = 1.0 / jnp.sqrt(attention_dim)
    params = {
        "w_lin": jax.random.uniform(keys[0], (hidden_size, input_size),
                                    minval=-k_lin, maxval=k_lin, dtype=jnp.float32),
        "b_lin": jax.random.uniform(keys[1], (hidden_size,),
                                    minval=-k_lin, maxval=k_lin, dtype=jnp.float32),
        "w_ih": jax.random.uniform(keys[2], (3 * attention_dim, hidden_size),
                                   minval=-k_gru, maxval=k_gru, dtype=jnp.float32),
        "b_ih": jax.random.uniform(keys[3], (3 * attention_dim,),
                                   minval=-k_gru, maxval=k_gru, dtype=jnp.float32),
        "w_hh": jax.random.uniform(keys[4], (3 * attention_dim, attention_dim),
                                   minval=-k_gru, maxval=k_gru, dtype=jnp.float32),
        "b_hh": jax.random.uniform(keys[5], (3 * attention_dim,),
                                   minval=-k_gru, maxval=k_gru, dtype=jnp.float32),
    }

    x = jax.random.normal(keys[6], (B, T, input_size), dtype=jnp.float32)
    hidden = jax.random.normal(keys[7], (N, attention_dim), dtype=jnp.float32)

    # Call-once preprocessing (hoisted out of the per-step path).
    # For v6e/v7x throughput at large N, pass mxu_dtype=jnp.bfloat16.
    prepped = prepare_params(params,
                             input_size=input_size,
                             hidden_size=hidden_size,
                             attention_dim=attention_dim,
                             mxu_dtype=jnp.float32)

    h_out = motion_encoder(x, hidden, prepped)
    h_out = jax.block_until_ready(h_out)

    h_ref = _reference(x, hidden, params,
                       hidden_size=hidden_size, attention_dim=attention_dim)
    assert h_out.shape == (N, attention_dim)
    assert jnp.allclose(h_out, h_ref, atol=1e-5, rtol=1e-5), "mismatch vs reference"

    print("KERNEL_OK")
</pallas_src>

<mosaic_0001>
module attributes {stable_mosaic.version = 11 : i64} {
  func.func @_motion_encoder_kernel(%arg0: i32, %arg1: memref<8x16xf32, #tpu.memory_space<vmem>>, %arg2: memref<8x128xf32, #tpu.memory_space<vmem>>, %arg3: memref<16x128xf32, #tpu.memory_space<vmem>>, %arg4: memref<1x128xf32, #tpu.memory_space<vmem>>, %arg5: memref<128x384xf32, #tpu.memory_space<vmem>>, %arg6: memref<128x384xf32, #tpu.memory_space<vmem>>, %arg7: memref<1x384xf32, #tpu.memory_space<vmem>>, %arg8: memref<1x128xf32, #tpu.memory_space<vmem>>, %arg9: memref<8x128xf32, #tpu.memory_space<vmem>>) attributes {dimension_semantics = [#tpu.dimension_semantics<parallel>], iteration_bounds = array<i64: 1>, scalar_prefetch = 0 : i64, scratch_operands = 0 : i64, tpu.core_type = #tpu.core_type<tc>, window_params = [{transform_indices = @transform_0, window_bounds = array<i64: 8, 16>}, {transform_indices = @transform_1, window_bounds = array<i64: 8, 128>}, {pipeline_mode = #tpu.pipeline_mode<synchronous>, transform_indices = @transform_2, window_bounds = array<i64: 16, 128>}, {pipeline_mode = #tpu.pipeline_mode<synchronous>, transform_indices = @transform_3, window_bounds = array<i64: 1, 128>}, {pipeline_mode = #tpu.pipeline_mode<synchronous>, transform_indices = @transform_4, window_bounds = array<i64: 128, 384>}, {pipeline_mode = #tpu.pipeline_mode<synchronous>, transform_indices = @transform_5, window_bounds = array<i64: 128, 384>}, {pipeline_mode = #tpu.pipeline_mode<synchronous>, transform_indices = @transform_6, window_bounds = array<i64: 1, 384>}, {pipeline_mode = #tpu.pipeline_mode<synchronous>, transform_indices = @transform_7, window_bounds = array<i64: 1, 128>}, {transform_indices = @transform_8, window_bounds = array<i64: 8, 128>}]} {
    %c0 = arith.constant 0 : index
    %c0_0 = arith.constant 0 : index
    %0 = vector.load %arg1[%c0, %c0_0] : memref<8x16xf32, #tpu.memory_space<vmem>>, vector<8x16xf32>
    %c0_1 = arith.constant 0 : index
    %c0_2 = arith.constant 0 : index
    %1 = vector.load %arg2[%c0_1, %c0_2] : memref<8x128xf32, #tpu.memory_space<vmem>>, vector<8x128xf32>
    %c0_3 = arith.constant 0 : index
    %c0_4 = arith.constant 0 : index
    %2 = vector.load %arg3[%c0_3, %c0_4] : memref<16x128xf32, #tpu.memory_space<vmem>>, vector<16x128xf32>
    %cst = arith.constant dense<0.000000e+00> : vector<8x128xf32>
    %3 = tpu.matmul %0, %2, %cst {dimension_numbers = #tpu.dot_dimension_numbers<[1], [0], [0], [1], [0, 0, 1, 1], [], []>} : vector<8x16xf32>, vector<16x128xf32>, vector<8x128xf32> -> vector<8x128xf32>
    %c0_5 = arith.constant 0 : index
    %c0_6 = arith.constant 0 : index
    %4 = vector.load %arg4[%c0_5, %c0_6] : memref<1x128xf32, #tpu.memory_space<vmem>>, vector<1x128xf32>
    %5 = vector.broadcast %4 : vector<1x128xf32> to vector<8x128xf32>
    %6 = arith.addf %3, %5 : vector<8x128xf32>
    %cst_7 = arith.constant 0.000000e+00 : f32
    %7 = vector.broadcast %cst_7 : f32 to vector<8x128xf32>
    %8 = arith.maximumf %6, %7 : vector<8x128xf32>
    %c0_8 = arith.constant 0 : index
    %c0_9 = arith.constant 0 : index
    %9 = vector.load %arg5[%c0_8, %c0_9] : memref<128x384xf32, #tpu.memory_space<vmem>>, vector<128x384xf32>
    %cst_10 = arith.constant dense<0.000000e+00> : vector<8x384xf32>
    %10 = tpu.matmul %8, %9, %cst_10 {dimension_numbers = #tpu.dot_dimension_numbers<[1], [0], [0], [1], [0, 0, 1, 1], [], []>} : vector<8x128xf32>, vector<128x384xf32>, vector<8x384xf32> -> vector<8x384xf32>
    %c0_11 = arith.constant 0 : index
    %c0_12 = arith.constant 0 : index
    %11 = vector.load %arg7[%c0_11, %c0_12] : memref<1x384xf32, #tpu.memory_space<vmem>>, vector<1x384xf32>
    %12 = vector.broadcast %11 : vector<1x384xf32> to vector<8x384xf32>
    %13 = arith.addf %10, %12 : vector<8x384xf32>
    %c0_13 = arith.constant 0 : index
    %c0_14 = arith.constant 0 : index
    %14 = vector.load %arg6[%c0_13, %c0_14] : memref<128x384xf32, #tpu.memory_space<vmem>>, vector<128x384xf32>
    %cst_15 = arith.constant dense<0.000000e+00> : vector<8x384xf32>
    %15 = tpu.matmul %1, %14, %cst_15 {dimension_numbers = #tpu.dot_dimension_numbers<[1], [0], [0], [1], [0, 0, 1, 1], [], []>} : vector<8x128xf32>, vector<128x384xf32>, vector<8x384xf32> -> vector<8x384xf32>
    %16 = vector.extract_strided_slice %13 {offsets = [0, 0], sizes = [8, 128], strides = [1, 1]} : vector<8x384xf32> to vector<8x128xf32>
    %17 = vector.extract_strided_slice %15 {offsets = [0, 0], sizes = [8, 128], strides = [1, 1]} : vector<8x384xf32> to vector<8x128xf32>
    %18 = arith.addf %16, %17 : vector<8x128xf32>
    %19 = arith.negf %18 : vector<8x128xf32>
    %20 = math.exp %19 : vector<8x128xf32>
    %cst_16 = arith.constant 1.000000e+00 : f32
    %21 = vector.broadcast %cst_16 : f32 to vector<8x128xf32>
    %22 = arith.addf %21, %20 : vector<8x128xf32>
    %23 = arith.divf %21, %22 : vector<8x128xf32>
    %24 = vector.extract_strided_slice %13 {offsets = [0, 128], sizes = [8, 128], strides = [1, 1]} : vector<8x384xf32> to vector<8x128xf32>
    %25 = vector.extract_strided_slice %15 {offsets = [0, 128], sizes = [8, 128], strides = [1, 1]} : vector<8x384xf32> to vector<8x128xf32>
    %26 = arith.addf %24, %25 : vector<8x128xf32>
    %27 = arith.negf %26 : vector<8x128xf32>
    %28 = math.exp %27 : vector<8x128xf32>
    %cst_17 = arith.constant 1.000000e+00 : f32
    %29 = vector.broadcast %cst_17 : f32 to vector<8x128xf32>
    %30 = arith.addf %29, %28 : vector<8x128xf32>
    %31 = arith.divf %29, %30 : vector<8x128xf32>
    %32 = vector.extract_strided_slice %13 {offsets = [0, 256], sizes = [8, 128], strides = [1, 1]} : vector<8x384xf32> to vector<8x128xf32>
    %33 = vector.extract_strided_slice %15 {offsets = [0, 256], sizes = [8, 128], strides = [1, 1]} : vector<8x384xf32> to vector<8x128xf32>
    %c0_18 = arith.constant 0 : index
    %c0_19 = arith.constant 0 : index
    %34 = vector.load %arg8[%c0_18, %c0_19] : memref<1x128xf32, #tpu.memory_space<vmem>>, vector<1x128xf32>
    %35 = vector.broadcast %34 : vector<1x128xf32> to vector<8x128xf32>
    %36 = arith.addf %33, %35 : vector<8x128xf32>
    %37 = arith.mulf %23, %36 : vector<8x128xf32>
    %38 = arith.addf %32, %37 : vector<8x128xf32>
    %39 = math.tanh %38 : vector<8x128xf32>
    %cst_20 = arith.constant 1.000000e+00 : f32
    %40 = vector.broadcast %cst_20 : f32 to vector<8x128xf32>
    %41 = arith.subf %40, %31 : vector<8x128xf32>
    %42 = arith.mulf %41, %39 : vector<8x128xf32>
    %43 = arith.mulf %31, %1 : vector<8x128xf32>
    %44 = arith.addf %42, %43 : vector<8x128xf32>
    %c0_21 = arith.constant 0 : index
    %c0_22 = arith.constant 0 : index
    %45 = vector.load %arg9[%c0_21, %c0_22] : memref<8x128xf32, #tpu.memory_space<vmem>>, vector<8x128xf32>
    tpu.vector_store %arg9[%c0_21, %c0_22], %44 {strides = array<i32>} : memref<8x128xf32, #tpu.memory_space<vmem>>, vector<8x128xf32>,
    return
  }
  func.func @transform_0(%arg0: i32) -> (i32, i32) {
    %c0_i32 = arith.constant 0 : i32
    %c0_i32_0 = arith.constant 0 : i32
    return %arg0, %c0_i32 : i32, i32
  }
  func.func @transform_1(%arg0: i32) -> (i32, i32) {
    %c0_i32 = arith.constant 0 : i32
    %c0_i32_0 = arith.constant 0 : i32
    return %arg0, %c0_i32 : i32, i32
  }
  func.func @transform_2(%arg0: i32) -> (i32, i32) {
    %c0_i32 = arith.constant 0 : i32
    %c0_i32_0 = arith.constant 0 : i32
    %c0_i32_1 = arith.constant 0 : i32
    return %c0_i32, %c0_i32_0 : i32, i32
  }
  func.func @transform_3(%arg0: i32) -> (i32, i32) {
    %c0_i32 = arith.constant 0 : i32
    %c0_i32_0 = arith.constant 0 : i32
    %c0_i32_1 = arith.constant 0 : i32
    return %c0_i32, %c0_i32_0 : i32, i32
  }
  func.func @transform_4(%arg0: i32) -> (i32, i32) {
    %c0_i32 = arith.constant 0 : i32
    %c0_i32_0 = arith.constant 0 : i32
    %c0_i32_1 = arith.constant 0 : i32
    return %c0_i32, %c0_i32_0 : i32, i32
  }
  func.func @transform_5(%arg0: i32) -> (i32, i32) {
    %c0_i32 = arith.constant 0 : i32
    %c0_i32_0 = arith.constant 0 : i32
    %c0_i32_1 = arith.constant 0 : i32
    return %c0_i32, %c0_i32_0 : i32, i32
  }
  func.func @transform_6(%arg0: i32) -> (i32, i32) {
    %c0_i32 = arith.constant 0 : i32
    %c0_i32_0 = arith.constant 0 : i32
    %c0_i32_1 = arith.constant 0 : i32
    return %c0_i32, %c0_i32_0 : i32, i32
  }
  func.func @transform_7(%arg0: i32) -> (i32, i32) {
    %c0_i32 = arith.constant 0 : i32
    %c0_i32_0 = arith.constant 0 : i32
    %c0_i32_1 = arith.constant 0 : i32
    return %c0_i32, %c0_i32_0 : i32, i32
  }
  func.func @transform_8(%arg0: i32) -> (i32, i32) {
    %c0_i32 = arith.constant 0 : i32
    %c0_i32_0 = arith.constant 0 : i32
    return %arg0, %c0_i32 : i32, i32
  }
}

</mosaic_0001>

<llo_original>
// kernel: tpu_custom_call.1
$region0: #{tpu_custom_call.1}
  #allocation0 [shape = 'u32[]', space=smem, size = 0x4, offset = 0x4, fixed_abs, tag = 'smem constant byte address 0x4 - core index']
  #allocation1 [shape = 'u32[144,128]{1,0:T(1,128)}', space=vmem, size = 0x12000, scoped, tag = 'internal scratch']
  %s0 = inlined_call_operand.hbm [shape: f32[8,16], index: 0, kind: input, shape index: {}]
  %s1 = inlined_call_operand.hbm [shape: f32[8,128], index: 1, kind: input, shape index: {}]
  %s2 = inlined_call_operand.hbm [shape: f32[16,128], index: 2, kind: input, shape index: {}]
  %s3 = inlined_call_operand.vmem [shape: f32[1,128], index: 3, kind: input, shape index: {}]
  %s4 = inlined_call_operand.hbm [shape: f32[128,384], index: 4, kind: input, shape index: {}]
  %s5 = inlined_call_operand.hbm [shape: f32[128,384], index: 5, kind: input, shape index: {}]
  %s6 = inlined_call_operand.vmem [shape: f32[1,384], index: 6, kind: input, shape index: {}]
  %s7 = inlined_call_operand.vmem [shape: f32[1,128], index: 7, kind: input, shape index: {}]
  %s8 = inlined_call_operand.hbm [shape: f32[8,128], index: 8, kind: output, shape index: {}]
  %s9 = sld [smem:[#allocation0]]
  $region62: #{tpu_custom_call.1} parent=0
    _
  %s11 = ssub.s32 1, %s9
  %s12 = scalar_select 0, %s11, %s9
  $region1: #{tpu_custom_call.1} parent=0
    #allocation2 [shape = 'u8[4096]{0}', space=vmem, size = 0x1000, scoped, tag = 'input window, operand 0, single buffered']
    #allocation3 [shape = 's32[1]{0}', space=sflag, size = 0x4, scoped, tag = 'scoped memory for tpu_custom_call.1']
    #allocation4 [shape = 's32[1]{0}', space=sflag, size = 0x4, scoped, tag = 'scoped memory for tpu_custom_call.1']
    #allocation5 [shape = 'u8[4096]{0}', space=vmem, size = 0x1000, scoped, tag = 'input window, operand 1, single buffered']
    #allocation6 [shape = 's32[1]{0}', space=sflag, size = 0x4, scoped, tag = 'scoped memory for tpu_custom_call.1']
    #allocation7 [shape = 'u8[8192]{0}', space=vmem, size = 0x2000, scoped, tag = 'input window, operand 2, single buffered']
    #allocation8 [shape = 'u8[196608]{0}', space=vmem, size = 0x30000, scoped, tag = 'input window, operand 4, single buffered']
    #allocation9 [shape = 's32[1]{0}', space=sflag, size = 0x4, scoped, tag = 'scoped memory for tpu_custom_call.1']
    #allocation10 [shape = 'u8[196608]{0}', space=vmem, size = 0x30000, scoped, tag = 'input window, operand 5, single buffered']
    #allocation11 [shape = 'u8[4096]{0}', space=vmem, size = 0x1000, scoped, tag = 'output window, operand 0, single buffered']
    %13 = vsyncpa [#allocation3], 0
    %14 = vsyncpa [#allocation6], 0
    %15 = vsyncpa [#allocation9], 0
    %16 = vsyncpa [#allocation4], 0
    // Predicated region
    $region2: #{tpu_custom_call.1} parent=1 // pred_check
      _
    $region3: #{tpu_custom_call.1} parent=1 // pred_check_branch
      %18 = sbr.rel (0) target = $region5
    $region4: #{tpu_custom_call.1} parent=1 // pred_region
      %s20 = ssub.s32 128, 128
      %21 = vsyncadd [#allocation3], %s20
      %s23 = sshll.u32 [#allocation2], 4
      %s24 = int_to_ptr.vmem [resolvable:$true] %s23
      %26 = dma.hbm_to_vmem [thread:$0]  %s0, 128, %s24, [#allocation3]
    $region5: #{tpu_custom_call.1} parent=1 // pred_fallthru
      _
    // Predicated region
    $region6: #{tpu_custom_call.1} parent=1 // pred_check
      _
    $region7: #{tpu_custom_call.1} parent=1 // pred_check_branch
      %28 = sbr.rel (0) target = $region9
    $region8: #{tpu_custom_call.1} parent=1 // pred_region
      %s30 = ssub.s32 128, 128
      %31 = vsyncadd [#allocation6], %s30
      %s33 = sshll.u32 [#allocation5], 4
      %s34 = int_to_ptr.vmem [resolvable:$true] %s33
      %36 = dma.hbm_to_vmem [thread:$0]  %s1, 128, %s34, [#allocation6]
    $region9: #{tpu_custom_call.1} parent=1 // pred_fallthru
      _
    // Predicated region
    $region10: #{tpu_custom_call.1} parent=1 // pred_check
      _
    $region11: #{tpu_custom_call.1} parent=1 // pred_check_branch
      %38 = sbr.rel (0) target = $region13
    $region12: #{tpu_custom_call.1} parent=1 // pred_region
      %s40 = ssub.s32 256, 256
      %41 = vsyncadd [#allocation6], %s40
      %s42 = sshll.u32 [#allocation7], 4
      %s43 = int_to_ptr.vmem [resolvable:$true] %s42
      %48 = dma.hbm_to_vmem [thread:$0]  %s2, 256, %s43, [#allocation6], 128, 128, 8
    $region13: #{tpu_custom_call.1} parent=1 // pred_fallthru
      _
    // Predicated region
    $region14: #{tpu_custom_call.1} parent=1 // pred_check
      _
    $region15: #{tpu_custom_call.1} parent=1 // pred_check_branch
      %50 = sbr.rel (0) target = $region17
    $region16: #{tpu_custom_call.1} parent=1 // pred_region
      _
    $region17: #{tpu_custom_call.1} parent=1 // pred_fallthru
      _
    // Predicated region
    $region18: #{tpu_custom_call.1} parent=1 // pred_check
      _
    $region19: #{tpu_custom_call.1} parent=1 // pred_check_branch
      %52 = sbr.rel (0) target = $region21
    $region20: #{tpu_custom_call.1} parent=1 // pred_region
      %s54 = ssub.s32 6144, 6144
      %55 = vsyncadd [#allocation9], %s54
      %s56 = sshll.u32 [#allocation8], 4
      %s57 = int_to_ptr.vmem [resolvable:$true] %s56
      %62 = dma.hbm_to_vmem [thread:$0]  %s4, 6144, %s57, [#allocation9], 384, 384, 24
    $region21: #{tpu_custom_call.1} parent=1 // pred_fallthru
      _
    // Predicated region
    $region22: #{tpu_custom_call.1} parent=1 // pred_check
      _
    $region23: #{tpu_custom_call.1} parent=1 // pred_check_branch
      %64 = sbr.rel (0) target = $region25
    $region24: #{tpu_custom_call.1} parent=1 // pred_region
      %s66 = ssub.s32 6144, 6144
      %67 = vsyncadd [#allocation9], %s66
      %s68 = sshll.u32 [#allocation10], 4
      %s69 = int_to_ptr.vmem [resolvable:$true] %s68
      %74 = dma.hbm_to_vmem [thread:$0]  %s5, 6144, %s69, [#allocation9], 384, 384, 24
    $region25: #{tpu_custom_call.1} parent=1 // pred_fallthru
      _
    // Predicated region
    $region26: #{tpu_custom_call.1} parent=1 // pred_check
      _
    $region27: #{tpu_custom_call.1} parent=1 // pred_check_branch
      %76 = sbr.rel (0) target = $region29
    $region28: #{tpu_custom_call.1} parent=1 // pred_region
      _
    $region29: #{tpu_custom_call.1} parent=1 // pred_fallthru
      _
    // Predicated region
    $region30: #{tpu_custom_call.1} parent=1 // pred_check
      _
    $region31: #{tpu_custom_call.1} parent=1 // pred_check_branch
      %78 = sbr.rel (0) target = $region33
    $region32: #{tpu_custom_call.1} parent=1 // pred_region
      _
    $region33: #{tpu_custom_call.1} parent=1 // pred_fallthru
      _
    // Predicated region
    $region34: #{tpu_custom_call.1} parent=1 // pred_check
      _
    $region35: #{tpu_custom_call.1} parent=1 // pred_check_branch
      %80 = sbr.rel (0) target = $region37
    $region36: #{tpu_custom_call.1} parent=1 // pred_region
      %81 = dma.done [#allocation3], 128
    $region37: #{tpu_custom_call.1} parent=1 // pred_fallthru
      _
    // Predicated region
    $region38: #{tpu_custom_call.1} parent=1 // pred_check
      _
    $region39: #{tpu_custom_call.1} parent=1 // pred_check_branch
      %83 = sbr.rel (0) target = $region41
    $region40: #{tpu_custom_call.1} parent=1 // pred_region
      %84 = dma.done [#allocation6], 128
    $region41: #{tpu_custom_call.1} parent=1 // pred_fallthru
      _
    // Predicated region
    $region42: #{tpu_custom_call.1} parent=1 // pred_check
      _
    $region43: #{tpu_custom_call.1} parent=1 // pred_check_branch
      %86 = sbr.rel (0) target = $region45
    $region44: #{tpu_custom_call.1} parent=1 // pred_region
      %87 = dma.done [#allocation6], 256
    $region45: #{tpu_custom_call.1} parent=1 // pred_fallthru
      _
    // Predicated region
    $region46: #{tpu_custom_call.1} parent=1 // pred_check
      _
    $region47: #{tpu_custom_call.1} parent=1 // pred_check_branch
      %89 = sbr.rel (0) target = $region49
    $region48: #{tpu_custom_call.1} parent=1 // pred_region
      %90 = dma.done [#allocation9], 6144
    $region49: #{tpu_custom_call.1} parent=1 // pred_fallthru
      _
    // Predicated region
    $region50: #{tpu_custom_call.1} parent=1 // pred_check
      _
    $region51: #{tpu_custom_call.1} parent=1 // pred_check_branch
      %92 = sbr.rel (0) target = $region53
    $region52: #{tpu_custom_call.1} parent=1 // pred_region
      %93 = dma.done [#allocation9], 6144
    $region53: #{tpu_custom_call.1} parent=1 // pred_fallthru
      _
    %v94 = vld [vmem:[#allocation2] sm:$0xff]
    %v95 = vld [vmem:[#allocation5] sm:$0xff]
    %v96 = vld [vmem:[#allocation7] sm:$0xff]
    %v97 = vld [vmem:[#allocation7 + $0x8] sm:$0xff]
    %v98 = vld [vmem:[%s3] sm:$0x1]
    %v100 = vlaneseq
    %v101 = vshrl.u32 %v100, 7
    %v102 = vsub.s32 0, %v101
    %v103 = vrot.slane %v98, %v102
    %vm105 = vcmask 130048
    %v107 = vsel %vm105, %v94, 0
    %109 = vmatprep.subr.mxu0 0.0
    %110 = vmatpush1.msra.mxu0 %v96
    %111 = vmatprep.subr.mxu0 0.0
    %112 = vmatpush1.msra.mxu0 %v97
    %113 = vmatprep.subr.mxu0 0.0
    %114 = vmatpush1.msra.mxu0 0.0
    %115 = vmatprep.subr.mxu0 0.0
    %116 = vmatpush1.msra.mxu0 0.0
    %117 = vmatprep.subr.mxu0 0.0
    %118 = vmatpush1.msra.mxu0 0.0
    %119 = vmatprep.subr.mxu0 0.0
    %120 = vmatpush1.msra.mxu0 0.0
    %121 = vmatprep.subr.mxu0 0.0
    %122 = vmatpush1.msra.mxu0 0.0
    %123 = vmatprep.subr.mxu0 0.0
    %124 = vmatpush1.msra.mxu0 0.0
    %125 = vmatprep.subr.mxu0 0.0
    %126 = vmatpush1.msra.mxu0 0.0
    %127 = vmatprep.subr.mxu0 0.0
    %128 = vmatpush1.msra.mxu0 0.0
    %129 = vmatprep.subr.mxu0 0.0
    %130 = vmatpush1.msra.mxu0 0.0
    %131 = vmatprep.subr.mxu0 0.0
    %132 = vmatpush1.msra.mxu0 0.0
    %133 = vmatprep.subr.mxu0 0.0
    %134 = vmatpush1.msra.mxu0 0.0
    %135 = vmatprep.subr.mxu0 0.0
    %136 = vmatpush1.msra.mxu0 0.0
    %137 = vmatprep.subr.mxu0 0.0
    %138 = vmatpush1.msra.mxu0 0.0
    %139 = vmatprep.subr.mxu0 0.0
    %140 = vmatpush1.msra.mxu0 0.0
    %141 = vmatprep.subr.mxu0 0.0
    %142 = vmatpush1.msra.mxu0 0.0
    %143 = vmatprep.subr.mxu0 0.0
    %144 = vmatpush1.msra.mxu0 0.0
    %145 = vmatprep.subr.mxu0 0.0
    %146 = vmatpush1.msra.mxu0 0.0
    %147 = vmatprep.subr.mxu0 0.0
    %148 = vmatpush1.msra.mxu0 0.0
    %149 = vmatprep.subr.mxu0 0.0
    %150 = vmatpush1.msra.mxu0 0.0
    %151 = vmatprep.subr.mxu0 0.0
    %152 = vmatpush1.msra.mxu0 0.0
    %153 = vmatprep.subr.mxu0 0.0
    %154 = vmatpush1.msra.mxu0 0.0
    %155 = vmatprep.subr.mxu0 0.0
    %156 = vmatpush1.msra.mxu0 0.0
    %157 = vmatprep.subr.mxu0 0.0
    %158 = vmatpush1.msra.mxu0 0.0
    %159 = vmatprep.subr.mxu0 0.0
    %160 = vmatpush1.msra.mxu0 0.0
    %161 = vmatprep.subr.mxu0 0.0
    %162 = vmatpush1.msra.mxu0 0.0
    %163 = vmatprep.subr.mxu0 0.0
    %164 = vmatpush1.msra.mxu0 0.0
    %165 = vmatprep.subr.mxu0 0.0
    %166 = vmatpush1.msra.mxu0 0.0
    %167 = vmatprep.subr.mxu0 0.0
    %168 = vmatpush1.msra.mxu0 0.0
    %169 = vmatprep.subr.mxu0 0.0
    %170 = vmatpush1.msra.mxu0 0.0
    %171 = vmatprep.subr.mxu0 0.0
    %172 = vmatpush1.msra.mxu0 0.0
    %173 = vmatprep.mubr.f32.mxu0 0.0
    %174 = vmatmul.mubr.f32.gmra.mrb[0].mxu0 %v107
    %v175 = vpop.f32.mrb[0].mxu0
    %v176 = vadd.f32 %v103, %v175
    %v177 = vpop.f32.mrb[0].mxu0
    %178 = vdwg.mxu0
    %v179 = vmax.f32 %v176, 0.0
    %v180 = vld [vmem:[#allocation8] sm:$0xff]
    %v181 = vld [vmem:[#allocation8 + $0x8] sm:$0xff]
    %v182 = vld [vmem:[#allocation8 + $0x10] sm:$0xff]
    %v183 = vld [vmem:[#allocation8 + $0x18] sm:$0xff]
    %v184 = vld [vmem:[#allocation8 + $0x20] sm:$0xff]
    %v185 = vld [vmem:[#allocation8 + $0x28] sm:$0xff]
    %v186 = vld [vmem:[#allocation8 + $0x30] sm:$0xff]
    %v187 = vld [vmem:[#allocation8 + $0x38] sm:$0xff]
    %v188 = vld [vmem:[#allocation8 + $0x40] sm:$0xff]
    %v189 = vld [vmem:[#allocation8 + $0x48] sm:$0xff]
    %v190 = vld [vmem:[#allocation8 + $0x50] sm:$0xff]
    %v191 = vld [vmem:[#allocation8 + $0x58] sm:$0xff]
    %v192 = vld [vmem:[#allocation8 + $0x60] sm:$0xff]
    %v193 = vld [vmem:[#allocation8 + $0x68] sm:$0xff]
    %v194 = vld [vmem:[#allocation8 + $0x70] sm:$0xff]
    %v195 = vld [vmem:[#allocation8 + $0x78] sm:$0xff]
    %v196 = vld [vmem:[#allocation8 + $0x80] sm:$0xff]
    %v197 = vld [vmem:[#allocation8 + $0x88] sm:$0xff]
    %v198 = vld [vmem:[#allocation8 + $0x90] sm:$0xff]
    %v199 = vld [vmem:[#allocation8 + $0x98] sm:$0xff]
    %v200 = vld [vmem:[#allocation8 + $0xa0] sm:$0xff]
    %v201 = vld [vmem:[#allocation8 + $0xa8] sm:$0xff]
    %v202 = vld [vmem:[#allocation8 + $0xb0] sm:$0xff]
    %v203 = vld [vmem:[#allocation8 + $0xb8] sm:$0xff]
    %v204 = vld [vmem:[#allocation8 + $0xc0] sm:$0xff]
    %v205 = vld [vmem:[#allocation8 + $0xc8] sm:$0xff]
    %v206 = vld [vmem:[#allocation8 + $0xd0] sm:$0xff]
    %v207 = vld [vmem:[#allocation8 + $0xd8] sm:$0xff]
    %v208 = vld [vmem:[#allocation8 + $0xe0] sm:$0xff]
    %v209 = vld [vmem:[#allocation8 + $0xe8] sm:$0xff]
    %v210 = vld [vmem:[#allocation8 + $0xf0] sm:$0xff]
    %v211 = vld [vmem:[#allocation8 + $0xf8] sm:$0xff]
    %v212 = vld [vmem:[#allocation8 + $0x100] sm:$0xff]
    %v213 = vld [vmem:[#allocation8 + $0x108] sm:$0xff]
    %v214 = vld [vmem:[#allocation8 + $0x110] sm:$0xff]
    %v215 = vld [vmem:[#allocation8 + $0x118] sm:$0xff]
    %v216 = vld [vmem:[#allocation8 + $0x120] sm:$0xff]
    %v217 = vld [vmem:[#allocation8 + $0x128] sm:$0xff]
    %v218 = vld [vmem:[#allocation8 + $0x130] sm:$0xff]
    %v219 = vld [vmem:[#allocation8 + $0x138] sm:$0xff]
    %v220 = vld [vmem:[#allocation8 + $0x140] sm:$0xff]
    %v221 = vld [vmem:[#allocation8 + $0x148] sm:$0xff]
    %v222 = vld [vmem:[#allocation8 + $0x150] sm:$0xff]
    %v223 = vld [vmem:[#allocation8 + $0x158] sm:$0xff]
    %v224 = vld [vmem:[#allocation8 + $0x160] sm:$0xff]
    %v225 = vld [vmem:[#allocation8 + $0x168] sm:$0xff]
    %v226 = vld [vmem:[#allocation8 + $0x170] sm:$0xff]
    %v227 = vld [vmem:[#allocation8 + $0x178] sm:$0xff]
    %v228 = vld [vmem:[%s6] sm:$0x7]
    %v230 = vlaneseq
    %v231 = vshrl.u32 %v230, 7
    %v232 = vsub.s32 0, %v231
    %v233 = vrot.slane %v228, %v232
    %v234 = vlaneseq
    %v235 = vshrl.u32 %v234, 7
    %v236 = vsub.s32 1, %v235
    %v237 = vrot.slane %v228, %v236
    %v238 = vlaneseq
    %v239 = vshrl.u32 %v238, 7
    %v240 = vsub.s32 2, %v239
    %v241 = vrot.slane %v228, %v240
    %245 = vmatprep.subr.mxu0 %v181
    %246 = vmatpush1.msra.mxu0 %v180
    %247 = vmatprep.subr.mxu0 %v184
    %248 = vmatpush1.msra.mxu0 %v183
    %249 = vmatprep.subr.mxu0 %v187
    %250 = vmatpush1.msra.mxu0 %v186
    %251 = vmatprep.subr.mxu0 %v190
    %252 = vmatpush1.msra.mxu0 %v189
    %253 = vmatprep.subr.mxu0 %v193
    %254 = vmatpush1.msra.mxu0 %v192
    %255 = vmatprep.subr.mxu0 %v196
    %256 = vmatpush1.msra.mxu0 %v195
    %257 = vmatprep.subr.mxu0 %v199
    %258 = vmatpush1.msra.mxu0 %v198
    %259 = vmatprep.subr.mxu0 %v202
    %260 = vmatpush1.msra.mxu0 %v201
    %261 = vmatprep.subr.mxu0 %v205
    %262 = vmatpush1.msra.mxu0 %v204
    %263 = vmatprep.subr.mxu0 %v208
    %264 = vmatpush1.msra.mxu0 %v207
    %265 = vmatprep.subr.mxu0 %v211
    %266 = vmatpush1.msra.mxu0 %v210
    %267 = vmatprep.subr.mxu0 %v214
    %268 = vmatpush1.msra.mxu0 %v213
    %269 = vmatprep.subr.mxu0 %v217
    %270 = vmatpush1.msra.mxu0 %v216
    %271 = vmatprep.subr.mxu0 %v220
    %272 = vmatpush1.msra.mxu0 %v219
    %273 = vmatprep.subr.mxu0 %v223
    %274 = vmatpush1.msra.mxu0 %v222
    %275 = vmatprep.subr.mxu0 %v226
    %276 = vmatpush1.msra.mxu0 %v225
    %277 = vmatprep.subr.mxu0 0.0
    %278 = vmatpush1.msra.mxu0 0.0
    %279 = vmatprep.subr.mxu0 0.0
    %280 = vmatpush1.msra.mxu0 0.0
    %281 = vmatprep.subr.mxu0 0.0
    %282 = vmatpush1.msra.mxu0 0.0
    %283 = vmatprep.subr.mxu0 0.0
    %284 = vmatpush1.msra.mxu0 0.0
    %285 = vmatprep.subr.mxu0 0.0
    %286 = vmatpush1.msra.mxu0 0.0
    %287 = vmatprep.subr.mxu0 0.0
    %288 = vmatpush1.msra.mxu0 0.0
    %289 = vmatprep.subr.mxu0 0.0
    %290 = vmatpush1.msra.mxu0 0.0
    %291 = vmatprep.subr.mxu0 0.0
    %292 = vmatpush1.msra.mxu0 0.0
    %293 = vmatprep.subr.mxu0 0.0
    %294 = vmatpush1.msra.mxu0 0.0
    %295 = vmatprep.subr.mxu0 0.0
    %296 = vmatpush1.msra.mxu0 0.0
    %297 = vmatprep.subr.mxu0 0.0
    %298 = vmatpush1.msra.mxu0 0.0
    %299 = vmatprep.subr.mxu0 0.0
    %300 = vmatpush1.msra.mxu0 0.0
    %301 = vmatprep.subr.mxu0 0.0
    %302 = vmatpush1.msra.mxu0 0.0
    %303 = vmatprep.subr.mxu0 0.0
    %304 = vmatpush1.msra.mxu0 0.0
    %305 = vmatprep.subr.mxu0 0.0
    %306 = vmatpush1.msra.mxu0 0.0
    %307 = vmatprep.subr.mxu0 0.0
    %308 = vmatpush1.msra.mxu0 0.0
    %309 = vmatprep.mubr.f32.mxu0 0.0
    %310 = vmatmul.mubr.f32.gmra.mrb[0].mxu0 %v179
    %v311 = vpop.f32.mrb[0].mxu0
    %v312 = vadd.f32 %v233, %v311
    %v313 = vpop.f32.mrb[0].mxu0
    %v314 = vadd.f32 %v237, %v313
    %315 = vdwg.mxu0
    %316 = vmatprep.subr.mxu0 0.0
    %317 = vmatpush1.msra.mxu0 %v182
    %318 = vmatprep.subr.mxu0 0.0
    %319 = vmatpush1.msra.mxu0 %v185
    %320 = vmatprep.subr.mxu0 0.0
    %321 = vmatpush1.msra.mxu0 %v188
    %322 = vmatprep.subr.mxu0 0.0
    %323 = vmatpush1.msra.mxu0 %v191
    %324 = vmatprep.subr.mxu0 0.0
    %325 = vmatpush1.msra.mxu0 %v194
    %326 = vmatprep.subr.mxu0 0.0
    %327 = vmatpush1.msra.mxu0 %v197
    %328 = vmatprep.subr.mxu0 0.0
    %329 = vmatpush1.msra.mxu0 %v200
    %330 = vmatprep.subr.mxu0 0.0
    %331 = vmatpush1.msra.mxu0 %v203
    %332 = vmatprep.subr.mxu0 0.0
    %333 = vmatpush1.msra.mxu0 %v206
    %334 = vmatprep.subr.mxu0 0.0
    %335 = vmatpush1.msra.mxu0 %v209
    %336 = vmatprep.subr.mxu0 0.0
    %337 = vmatpush1.msra.mxu0 %v212
    %338 = vmatprep.subr.mxu0 0.0
    %339 = vmatpush1.msra.mxu0 %v215
    %340 = vmatprep.subr.mxu0 0.0
    %341 = vmatpush1.msra.mxu0 %v218
    %342 = vmatprep.subr.mxu0 0.0
    %343 = vmatpush1.msra.mxu0 %v221
    %344 = vmatprep.subr.mxu0 0.0
    %345 = vmatpush1.msra.mxu0 %v224
    %346 = vmatprep.subr.mxu0 0.0
    %347 = vmatpush1.msra.mxu0 %v227
    %348 = vmatprep.subr.mxu0 0.0
    %349 = vmatpush1.msra.mxu0 0.0
    %350 = vmatprep.subr.mxu0 0.0
    %351 = vmatpush1.msra.mxu0 0.0
    %352 = vmatprep.subr.mxu0 0.0
    %353 = vmatpush1.msra.mxu0 0.0
    %354 = vmatprep.subr.mxu0 0.0
    %355 = vmatpush1.msra.mxu0 0.0
    %356 = vmatprep.subr.mxu0 0.0
    %357 = vmatpush1.msra.mxu0 0.0
    %358 = vmatprep.subr.mxu0 0.0
    %359 = vmatpush1.msra.mxu0 0.0
    %360 = vmatprep.subr.mxu0 0.0
    %361 = vmatpush1.msra.mxu0 0.0
    %362 = vmatprep.subr.mxu0 0.0
    %363 = vmatpush1.msra.mxu0 0.0
    %364 = vmatprep.subr.mxu0 0.0
    %365 = vmatpush1.msra.mxu0 0.0
    %366 = vmatprep.subr.mxu0 0.0
    %367 = vmatpush1.msra.mxu0 0.0
    %368 = vmatprep.subr.mxu0 0.0
    %369 = vmatpush1.msra.mxu0 0.0
    %370 = vmatprep.subr.mxu0 0.0
    %371 = vmatpush1.msra.mxu0 0.0
    %372 = vmatprep.subr.mxu0 0.0
    %373 = vmatpush1.msra.mxu0 0.0
    %374 = vmatprep.subr.mxu0 0.0
    %375 = vmatpush1.msra.mxu0 0.0
    %376 = vmatprep.subr.mxu0 0.0
    %377 = vmatpush1.msra.mxu0 0.0
    %378 = vmatprep.subr.mxu0 0.0
    %379 = vmatpush1.msra.mxu0 0.0
    %380 = vmatprep.mubr.f32.mxu0 0.0
    %381 = vmatmul.mubr.f32.gmra.mrb[0].mxu0 %v179
    %v382 = vpop.f32.mrb[0].mxu0
    %v383 = vadd.f32 %v241, %v382
    %v384 = vpop.f32.mrb[0].mxu0
    %385 = vdwg.mxu0
    %v386 = vld [vmem:[#allocation10] sm:$0xff]
    %v387 = vld [vmem:[#allocation10 + $0x8] sm:$0xff]
    %v388 = vld [vmem:[#allocation10 + $0x10] sm:$0xff]
    %v389 = vld [vmem:[#allocation10 + $0x18] sm:$0xff]
    %v390 = vld [vmem:[#allocation10 + $0x20] sm:$0xff]
    %v391 = vld [vmem:[#allocation10 + $0x28] sm:$0xff]
    %v392 = vld [vmem:[#allocation10 + $0x30] sm:$0xff]
    %v393 = vld [vmem:[#allocation10 + $0x38] sm:$0xff]
    %v394 = vld [vmem:[#allocation10 + $0x40] sm:$0xff]
    %v395 = vld [vmem:[#allocation10 + $0x48] sm:$0xff]
    %v396 = vld [vmem:[#allocation10 + $0x50] sm:$0xff]
    %v397 = vld [vmem:[#allocation10 + $0x58] sm:$0xff]
    %v398 = vld [vmem:[#allocation10 + $0x60] sm:$0xff]
    %v399 = vld [vmem:[#allocation10 + $0x68] sm:$0xff]
    %v400 = vld [vmem:[#allocation10 + $0x70] sm:$0xff]
    %v401 = vld [vmem:[#allocation10 + $0x78] sm:$0xff]
    %v402 = vld [vmem:[#allocation10 + $0x80] sm:$0xff]
    %v403 = vld [vmem:[#allocation10 + $0x88] sm:$0xff]
    %v404 = vld [vmem:[#allocation10 + $0x90] sm:$0xff]
    %v405 = vld [vmem:[#allocation10 + $0x98] sm:$0xff]
    %v406 = vld [vmem:[#allocation10 + $0xa0] sm:$0xff]
    %v407 = vld [vmem:[#allocation10 + $0xa8] sm:$0xff]
    %v408 = vld [vmem:[#allocation10 + $0xb0] sm:$0xff]
    %v409 = vld [vmem:[#allocation10 + $0xb8] sm:$0xff]
    %v410 = vld [vmem:[#allocation10 + $0xc0] sm:$0xff]
    %v411 = vld [vmem:[#allocation10 + $0xc8] sm:$0xff]
    %v412 = vld [vmem:[#allocation10 + $0xd0] sm:$0xff]
    %v413 = vld [vmem:[#allocation10 + $0xd8] sm:$0xff]
    %v414 = vld [vmem:[#allocation10 + $0xe0] sm:$0xff]
    %v415 = vld [vmem:[#allocation10 + $0xe8] sm:$0xff]
    %v416 = vld [vmem:[#allocation10 + $0xf0] sm:$0xff]
    %v417 = vld [vmem:[#allocation10 + $0xf8] sm:$0xff]
    %v418 = vld [vmem:[#allocation10 + $0x100] sm:$0xff]
    %v419 = vld [vmem:[#allocation10 + $0x108] sm:$0xff]
    %v420 = vld [vmem:[#allocation10 + $0x110] sm:$0xff]
    %v421 = vld [vmem:[#allocation10 + $0x118] sm:$0xff]
    %v422 = vld [vmem:[#allocation10 + $0x120] sm:$0xff]
    %v423 = vld [vmem:[#allocation10 + $0x128] sm:$0xff]
    %v424 = vld [vmem:[#allocation10 + $0x130] sm:$0xff]
    %v425 = vld [vmem:[#allocation10 + $0x138] sm:$0xff]
    %v426 = vld [vmem:[#allocation10 + $0x140] sm:$0xff]
    %v427 = vld [vmem:[#allocation10 + $0x148] sm:$0xff]
    %v428 = vld [vmem:[#allocation10 + $0x150] sm:$0xff]
    %v429 = vld [vmem:[#allocation10 + $0x158] sm:$0xff]
    %v430 = vld [vmem:[#allocation10 + $0x160] sm:$0xff]
    %v431 = vld [vmem:[#allocation10 + $0x168] sm:$0xff]
    %v432 = vld [vmem:[#allocation10 + $0x170] sm:$0xff]
    %v433 = vld [vmem:[#allocation10 + $0x178] sm:$0xff]
    %434 = vmatprep.subr.mxu0 %v387
    %435 = vmatpush1.msra.mxu0 %v386
    %436 = vmatprep.subr.mxu0 %v390
    %437 = vmatpush1.msra.mxu0 %v389
    %438 = vmatprep.subr.mxu0 %v393
    %439 = vmatpush1.msra.mxu0 %v392
    %440 = vmatprep.subr.mxu0 %v396
    %441 = vmatpush1.msra.mxu0 %v395
    %442 = vmatprep.subr.mxu0 %v399
    %443 = vmatpush1.msra.mxu0 %v398
    %444 = vmatprep.subr.mxu0 %v402
    %445 = vmatpush1.msra.mxu0 %v401
    %446 = vmatprep.subr.mxu0 %v405
    %447 = vmatpush1.msra.mxu0 %v404
    %448 = vmatprep.subr.mxu0 %v408
    %449 = vmatpush1.msra.mxu0 %v407
    %450 = vmatprep.subr.mxu0 %v411
    %451 = vmatpush1.msra.mxu0 %v410
    %452 = vmatprep.subr.mxu0 %v414
    %453 = vmatpush1.msra.mxu0 %v413
    %454 = vmatprep.subr.mxu0 %v417
    %455 = vmatpush1.msra.mxu0 %v416
    %456 = vmatprep.subr.mxu0 %v420
    %457 = vmatpush1.msra.mxu0 %v419
    %458 = vmatprep.subr.mxu0 %v423
    %459 = vmatpush1.msra.mxu0 %v422
    %460 = vmatprep.subr.mxu0 %v426
    %461 = vmatpush1.msra.mxu0 %v425
    %462 = vmatprep.subr.mxu0 %v429
    %463 = vmatpush1.msra.mxu0 %v428
    %464 = vmatprep.subr.mxu0 %v432
    %465 = vmatpush1.msra.mxu0 %v431
    %466 = vmatprep.subr.mxu0 0.0
    %467 = vmatpush1.msra.mxu0 0.0
    %468 = vmatprep.subr.mxu0 0.0
    %469 = vmatpush1.msra.mxu0 0.0
    %470 = vmatprep.subr.mxu0 0.0
    %471 = vmatpush1.msra.mxu0 0.0
    %472 = vmatprep.subr.mxu0 0.0
    %473 = vmatpush1.msra.mxu0 0.0
    %474 = vmatprep.subr.mxu0 0.0
    %475 = vmatpush1.msra.mxu0 0.0
    %476 = vmatprep.subr.mxu0 0.0
    %477 = vmatpush1.msra.mxu0 0.0
    %478 = vmatprep.subr.mxu0 0.0
    %479 = vmatpush1.msra.mxu0 0.0
    %480 = vmatprep.subr.mxu0 0.0
    %481 = vmatpush1.msra.mxu0 0.0
    %482 = vmatprep.subr.mxu0 0.0
    %483 = vmatpush1.msra.mxu0 0.0
    %484 = vmatprep.subr.mxu0 0.0
    %485 = vmatpush1.msra.mxu0 0.0
    %486 = vmatprep.subr.mxu0 0.0
    %487 = vmatpush1.msra.mxu0 0.0
    %488 = vmatprep.subr.mxu0 0.0
    %489 = vmatpush1.msra.mxu0 0.0
    %490 = vmatprep.subr.mxu0 0.0
    %491 = vmatpush1.msra.mxu0 0.0
    %492 = vmatprep.subr.mxu0 0.0
    %493 = vmatpush1.msra.mxu0 0.0
    %494 = vmatprep.subr.mxu0 0.0
    %495 = vmatpush1.msra.mxu0 0.0
    %496 = vmatprep.subr.mxu0 0.0
    %497 = vmatpush1.msra.mxu0 0.0
    %498 = vmatprep.mubr.f32.mxu0 0.0
    %499 = vmatmul.mubr.f32.gmra.mrb[0].mxu0 %v95
    %v500 = vpop.f32.mrb[0].mxu0
    %v501 = vadd.f32 0.0, %v500
    %v502 = vpop.f32.mrb[0].mxu0
    %v503 = vadd.f32 0.0, %v502
    %504 = vdwg.mxu0
    %505 = vmatprep.subr.mxu0 0.0
    %506 = vmatpush1.msra.mxu0 %v388
    %507 = vmatprep.subr.mxu0 0.0
    %508 = vmatpush1.msra.mxu0 %v391
    %509 = vmatprep.subr.mxu0 0.0
    %510 = vmatpush1.msra.mxu0 %v394
    %511 = vmatprep.subr.mxu0 0.0
    %512 = vmatpush1.msra.mxu0 %v397
    %513 = vmatprep.subr.mxu0 0.0
    %514 = vmatpush1.msra.mxu0 %v400
    %515 = vmatprep.subr.mxu0 0.0
    %516 = vmatpush1.msra.mxu0 %v403
    %517 = vmatprep.subr.mxu0 0.0
    %518 = vmatpush1.msra.mxu0 %v406
    %519 = vmatprep.subr.mxu0 0.0
    %520 = vmatpush1.msra.mxu0 %v409
    %521 = vmatprep.subr.mxu0 0.0
    %522 = vmatpush1.msra.mxu0 %v412
    %523 = vmatprep.subr.mxu0 0.0
    %524 = vmatpush1.msra.mxu0 %v415
    %525 = vmatprep.subr.mxu0 0.0
    %526 = vmatpush1.msra.mxu0 %v418
    %527 = vmatprep.subr.mxu0 0.0
    %528 = vmatpush1.msra.mxu0 %v421
    %529 = vmatprep.subr.mxu0 0.0
    %530 = vmatpush1.msra.mxu0 %v424
    %531 = vmatprep.subr.mxu0 0.0
    %532 = vmatpush1.msra.mxu0 %v427
    %533 = vmatprep.subr.mxu0 0.0
    %534 = vmatpush1.msra.mxu0 %v430
    %535 = vmatprep.subr.mxu0 0.0
    %536 = vmatpush1.msra.mxu0 %v433
    %537 = vmatprep.subr.mxu0 0.0
    %538 = vmatpush1.msra.mxu0 0.0
    %539 = vmatprep.subr.mxu0 0.0
    %540 = vmatpush1.msra.mxu0 0.0
    %541 = vmatprep.subr.mxu0 0.0
    %542 = vmatpush1.msra.mxu0 0.0
    %543 = vmatprep.subr.mxu0 0.0
    %544 = vmatpush1.msra.mxu0 0.0
    %545 = vmatprep.subr.mxu0 0.0
    %546 = vmatpush1.msra.mxu0 0.0
    %547 = vmatprep.subr.mxu0 0.0
    %548 = vmatpush1.msra.mxu0 0.0
    %549 = vmatprep.subr.mxu0 0.0
    %550 = vmatpush1.msra.mxu0 0.0
    %551 = vmatprep.subr.mxu0 0.0
    %552 = vmatpush1.msra.mxu0 0.0
    %553 = vmatprep.subr.mxu0 0.0
    %554 = vmatpush1.msra.mxu0 0.0
    %555 = vmatprep.subr.mxu0 0.0
    %556 = vmatpush1.msra.mxu0 0.0
    %557 = vmatprep.subr.mxu0 0.0
    %558 = vmatpush1.msra.mxu0 0.0
    %559 = vmatprep.subr.mxu0 0.0
    %560 = vmatpush1.msra.mxu0 0.0
    %561 = vmatprep.subr.mxu0 0.0
    %562 = vmatpush1.msra.mxu0 0.0
    %563 = vmatprep.subr.mxu0 0.0
    %564 = vmatpush1.msra.mxu0 0.0
    %565 = vmatprep.subr.mxu0 0.0
    %566 = vmatpush1.msra.mxu0 0.0
    %567 = vmatprep.subr.mxu0 0.0
    %568 = vmatpush1.msra.mxu0 0.0
    %569 = vmatprep.mubr.f32.mxu0 0.0
    %570 = vmatmul.mubr.f32.gmra.mrb[0].mxu0 %v95
    %v571 = vpop.f32.mrb[0].mxu0
    %v572 = vadd.f32 0.0, %v571
    %v573 = vpop.f32.mrb[0].mxu0
    %574 = vdwg.mxu0
    %v575 = vadd.f32 %v312, %v501
    %v576 = vxor.u32 %v575, 2147483648
    %v577 = vmul.f32 %v576, 1.442695
    %v578 = vpow.pop %v577
    %v579 = vadd.f32 %v578, 1.0
    %v580 = vrcp.pop %v579
    %v581 = vmul.f32 1.0, %v580
    %v582 = vadd.f32 %v314, %v503
    %v583 = vxor.u32 %v582, 2147483648
    %v584 = vmul.f32 %v583, 1.442695
    %v585 = vpow.pop %v584
    %v586 = vadd.f32 %v585, 1.0
    %v587 = vrcp.pop %v586
    %v588 = vmul.f32 1.0, %v587
    %v589 = vld [vmem:[%s7] sm:$0x1]
    %v591 = vlaneseq
    %v592 = vshrl.u32 %v591, 7
    %v593 = vsub.s32 0, %v592
    %v594 = vrot.slane %v589, %v593
    %v596 = vadd.f32 %v572, %v594
    %v597 = vmul.f32 %v581, %v596
    %v598 = vadd.f32 %v383, %v597
    %v599 = vtanh.pop %v598
    %v600 = vsub.f32 1.0, %v588
    %v601 = vmul.f32 %v600, %v599
    %v602 = vmul.f32 %v588, %v95
    %v603 = vadd.f32 %v601, %v602
    %604 = vst [vmem:[#allocation11] sm:$0xff] %v603
    // Predicated region
    $region54: #{tpu_custom_call.1} parent=1 // pred_check
      _
    $region55: #{tpu_custom_call.1} parent=1 // pred_check_branch
      %606 = sbr.rel (0) target = $region57
    $region56: #{tpu_custom_call.1} parent=1 // pred_region
      %s608 = ssub.s32 128, 128
      %609 = vsyncadd [#allocation4], %s608
      %s611 = sshll.u32 [#allocation11], 4
      %s612 = int_to_ptr.vmem [resolvable:$true] %s611
      %614 = dma.vmem_to_hbm [thread:$0]  %s612, 128, %s8, [#allocation4]
    $region57: #{tpu_custom_call.1} parent=1 // pred_fallthru
      _
    // Predicated region
    $region58: #{tpu_custom_call.1} parent=1 // pred_check
      _
    $region59: #{tpu_custom_call.1} parent=1 // pred_check_branch
      %616 = sbr.rel (0) target = $region61
    $region60: #{tpu_custom_call.1} parent=1 // pred_region
      %617 = dma.done [#allocation4], 128
    $region61: #{tpu_custom_call.1} parent=1 // pred_fallthru
      _
    %618 = vsyncpa [#allocation3], 1
    %619 = vsyncpa [#allocation6], 1
    %620 = vsyncpa [#allocation9], 1
    %621 = vsyncpa [#allocation4], 1

</llo_original>
